<compile_context>
chip_gen: v7x
topology: tpu7x:2x2x1
jax: 0.10.0
libtpu: 0.0.40
codegen_flags: <defaults>
</compile_context>

<pallas_src>
import jax
import jax.numpy as jnp
from jax.experimental import pallas as pl
from jax.experimental.pallas import tpu as pltpu

LANE = 128
# 2 MiB per block: with input+output each double-buffered this is ~8 MiB of
# VMEM -> safe on v5e (16 MiB scoped default) and v6e/v7x, while large enough
# that per-grid-step overhead is negligible (near HBM roofline).
MAX_BLOCK_BYTES = 2 << 20


def _copy_kernel(x_ref, o_ref):
    # Identity copy of the current tile (the only data movement of a `view`).
    o_ref[...] = x_ref[...]


def _choose_cols(total):
    """Widest lane-dense column count (multiple of 128) dividing `total`."""
    for c in (8192, 4096, 2048, 1024, 512, 256, 128):
        if total % c == 0:
            return c
    return None


def _choose_tile_rows(n_rows, n_cols, itemsize):
    """Pick a row tile: divides n_rows, sublane-aligned, block <= MAX_BLOCK_BYTES.

    Prefers a tiling with grid >= 2 (lets v7x's two TensorCores share the
    stream) as long as blocks stay >= ~1 MiB; otherwise takes the largest tile.
    Returns None if no aligned tile exists (caller uses full-extent fallback).
    """
    row_bytes = n_cols * itemsize
    limit = min(n_rows, max(1, MAX_BLOCK_BYTES // row_bytes))

    candidates = []
    for align in (32, 16, 8):  # 32 covers int8/fp8, 16 covers bf16, 8 covers f32
        candidates = [t for t in range(align, limit + 1, align) if n_rows % t == 0]
        if candidates:
            break
    if not candidates:
        return None

    # Prefer grid >= 2 tiles whose blocks are still big (>= half the cap).
    multi_big = [
        t for t in candidates
        if n_rows // t >= 2 and t * row_bytes >= MAX_BLOCK_BYTES // 2
    ]
    if multi_big:
        return max(multi_big)
    return max(candidates)


def _pallas_identity_copy_2d(x2d, tile_rows):
    """Tiled identity copy of a lane-dense 2D slab (no padding)."""
    n_rows, n_cols = x2d.shape
    grid = (n_rows // tile_rows,)
    return pl.pallas_call(
        _copy_kernel,
        out_shape=jax.ShapeDtypeStruct((n_rows, n_cols), x2d.dtype),
        grid_spec=pltpu.PrefetchScalarGridSpec(
            num_scalar_prefetch=0,
            grid=grid,
            in_specs=[pl.BlockSpec((tile_rows, n_cols), lambda i: (i, 0))],
            out_specs=pl.BlockSpec((tile_rows, n_cols), lambda i: (i, 0)),
        ),
        compiler_params=pltpu.CompilerParams(
            dimension_semantics=("parallel",),
        ),
    )(x2d)


def _pallas_identity_copy_single_block(x2d):
    """Fallback: one block covering the full extent (always a legal shape).

    Used when the flat length cannot be factored into an aligned tiled slab
    (e.g. not a multiple of 128, or too few rows to tile).  For the small /
    irregular shapes this path targets, a single block fits VMEM easily.
    """
    n_rows, n_cols = x2d.shape
    return pl.pallas_call(
        _copy_kernel,
        out_shape=jax.ShapeDtypeStruct((n_rows, n_cols), x2d.dtype),
        grid_spec=pltpu.PrefetchScalarGridSpec(
            num_scalar_prefetch=0,
            grid=(1,),
            in_specs=[pl.BlockSpec((n_rows, n_cols), lambda i: (0, 0))],
            out_specs=pl.BlockSpec((n_rows, n_cols), lambda i: (0, 0)),
        ),
        compiler_params=pltpu.CompilerParams(
            dimension_semantics=("arbitrary",),
        ),
    )(x2d)


def _resolve_shape(total, shape):
    """torch.view-style shape resolution with a single optional -1."""
    shape = tuple(int(s) for s in shape)
    if shape.count(-1) > 1:
        raise ValueError(f"only one -1 allowed in view shape, got {shape}")
    if -1 in shape:
        known = 1
        for s in shape:
            if s != -1:
                known *= s
        if known == 0 or total % known != 0:
            raise ValueError(f"cannot infer -1 for view shape {shape} from {total} elements")
        shape = tuple(total // known if s == -1 else s for s in shape)
    prod = 1
    for s in shape:
        prod *= s
    if prod != total:
        raise ValueError(f"view shape {shape} incompatible with {total} elements")
    return shape


def view_forward(x, shape):
    """Pallas equivalent of torch `x.view(*shape)` on a contiguous input."""
    total = int(x.size)
    shape = _resolve_shape(total, shape)

    if total == 0:
        return jnp.reshape(x, shape)

    flat = jnp.reshape(x, (-1,))  # row-major flatten: metadata only
    itemsize = flat.dtype.itemsize

    n_cols = _choose_cols(total)
    if n_cols is None:
        # Flat length not a multiple of 128: copy as one full-extent block.
        out2d = _pallas_identity_copy_single_block(flat.reshape(1, total))
    else:
        n_rows = total // n_cols
        x2d = flat.reshape(n_rows, n_cols)
        tile_rows = _choose_tile_rows(n_rows, n_cols, itemsize)
        if tile_rows is None:
            out2d = _pallas_identity_copy_single_block(x2d)
        else:
            out2d = _pallas_identity_copy_2d(x2d, tile_rows)

    return out2d.reshape(shape)  # the actual "view" (metadata reshape)


class View:
    """Mirror of the PyTorch module: View(shape)(x) -> x.view(*shape)."""

    def __init__(self, shape):
        self.shape = shape

    def __call__(self, x):
        return view_forward(x, self.shape)


if __name__ == "__main__":
    key = jax.random.PRNGKey(0)

    # 1) Small example consistent with a conv feature-map use: NCHW -> (N, C, H*W)
    x = jax.random.normal(key, (2, 4, 16, 16), dtype=jnp.float32)
    out = View((2, 4, 256))(x)
    out = jax.block_until_ready(out)
    ref = x.reshape(2, 4, 256)
    assert out.shape == ref.shape and out.dtype == ref.dtype
    assert bool(jnp.array_equal(out, ref))

    # 2) -1 inference path on the same small input.
    out2 = View((-1, 256))(x)
    out2 = jax.block_until_ready(out2)
    ref2 = x.reshape(-1, 256)
    assert out2.shape == ref2.shape
    assert bool(jnp.array_equal(out2, ref2))

    # 3) Slightly larger input to exercise the tiled multi-block path
    #    (n_rows=64 at 8192 cols -> 1 MiB blocks, grid of 2, parallel axis).
    k2 = jax.random.PRNGKey(0)
    x3 = jax.random.normal(k2, (16, 8, 64, 64), dtype=jnp.float32)
    out3 = View((16, 8, 4096))(x3)
    out3 = jax.block_until_ready(out3)
    ref3 = x3.reshape(16, 8, 4096)
    assert out3.shape == ref3.shape
    assert bool(jnp.array_equal(out3, ref3))

    print("KERNEL_OK")
</pallas_src>

<mosaic_0001>
module attributes {stable_mosaic.version = 11 : i64} {
  func.func @_copy_kernel(%arg0: i32, %arg1: memref<1x2048xf32, #tpu.memory_space<vmem>>, %arg2: memref<1x2048xf32, #tpu.memory_space<vmem>>) attributes {dimension_semantics = [#tpu.dimension_semantics<arbitrary>], iteration_bounds = array<i64: 1>, scalar_prefetch = 0 : i64, scratch_operands = 0 : i64, tpu.core_type = #tpu.core_type<tc>, window_params = [{pipeline_mode = #tpu.pipeline_mode<synchronous>, transform_indices = @transform_0, window_bounds = array<i64: 1, 2048>}, {pipeline_mode = #tpu.pipeline_mode<synchronous>, transform_indices = @transform_1, window_bounds = array<i64: 1, 2048>}]} {
    %c0 = arith.constant 0 : index
    %c0_0 = arith.constant 0 : index
    %0 = vector.load %arg1[%c0, %c0_0] : memref<1x2048xf32, #tpu.memory_space<vmem>>, vector<1x2048xf32>
    %c0_1 = arith.constant 0 : index
    %c0_2 = arith.constant 0 : index
    %1 = vector.load %arg2[%c0_1, %c0_2] : memref<1x2048xf32, #tpu.memory_space<vmem>>, vector<1x2048xf32>
    tpu.vector_store %arg2[%c0_1, %c0_2], %0 {strides = array<i32>} : memref<1x2048xf32, #tpu.memory_space<vmem>>, vector<1x2048xf32>,
    return
  }
  func.func @transform_0(%arg0: i32) -> (i32, i32) {
    %c0_i32 = arith.constant 0 : i32
    %c0_i32_0 = arith.constant 0 : i32
    %c0_i32_1 = arith.constant 0 : i32
    return %c0_i32, %c0_i32_0 : i32, i32
  }
  func.func @transform_1(%arg0: i32) -> (i32, i32) {
    %c0_i32 = arith.constant 0 : i32
    %c0_i32_0 = arith.constant 0 : i32
    %c0_i32_1 = arith.constant 0 : i32
    return %c0_i32, %c0_i32_0 : i32, i32
  }
}

</mosaic_0001>

<llo_original>
// kernel: tpu_custom_call.1
$region0: #{tpu_custom_call.1}
  #allocation0 [shape = 'u32[]', space=smem, size = 0x4, offset = 0x4, fixed_abs, tag = 'smem constant byte address 0x4 - core index']
  #allocation1 [shape = 'u32[144,128]{1,0:T(1,128)}', space=vmem, size = 0x12000, scoped, tag = 'internal scratch']
  %s0 = inlined_call_operand.hbm [shape: f32[1,2048], index: 0, kind: input, shape index: {}]
  %s1 = inlined_call_operand.hbm [shape: f32[1,2048], index: 1, kind: output, shape index: {}]
  %s2 = sld [smem:[#allocation0]]
  $region18: #{tpu_custom_call.1} parent=0
    _
  %s4 = ssub.s32 1, %s2
  %s5 = scalar_select 0, %s4, %s2
  $region1: #{tpu_custom_call.1} parent=0
    #allocation2 [shape = 'u8[8192]{0}', space=vmem, size = 0x2000, scoped, tag = 'input window, operand 0, single buffered']
    #allocation3 [shape = 's32[1]{0}', space=sflag, size = 0x4, scoped, tag = 'scoped memory for tpu_custom_call.1']
    #allocation4 [shape = 's32[1]{0}', space=sflag, size = 0x4, scoped, tag = 'scoped memory for tpu_custom_call.1']
    #allocation5 [shape = 'u8[8192]{0}', space=vmem, size = 0x2000, scoped, tag = 'output window, operand 0, single buffered']
    %6 = vsyncpa [#allocation3], 0
    %7 = vsyncpa [#allocation4], 0
    // Predicated region
    $region2: #{tpu_custom_call.1} parent=1 // pred_check
      _
    $region3: #{tpu_custom_call.1} parent=1 // pred_check_branch
      %9 = sbr.rel (0) target = $region5
    $region4: #{tpu_custom_call.1} parent=1 // pred_region
      %s11 = ssub.s32 256, 256
      %12 = vsyncadd [#allocation3], %s11
      %s14 = sshll.u32 [#allocation2], 4
      %s15 = int_to_ptr.vmem [resolvable:$true] %s14
      %17 = dma.hbm_to_vmem [thread:$0]  %s0, 256, %s15, [#allocation3]
    $region5: #{tpu_custom_call.1} parent=1 // pred_fallthru
      _
    // Predicated region
    $region6: #{tpu_custom_call.1} parent=1 // pred_check
      _
    $region7: #{tpu_custom_call.1} parent=1 // pred_check_branch
      %19 = sbr.rel (0) target = $region9
    $region8: #{tpu_custom_call.1} parent=1 // pred_region
      %20 = dma.done [#allocation3], 256
    $region9: #{tpu_custom_call.1} parent=1 // pred_fallthru
      _
    %v21 = vld [vmem:[#allocation2] sm:$0xff]
    %v22 = vld [vmem:[#allocation2 + $0x8] sm:$0xff]
    %23 = vst [vmem:[#allocation5] sm:$0xff] %v21
    %24 = vst [vmem:[#allocation5 + $0x8] sm:$0xff] %v22
    // Predicated region
    $region10: #{tpu_custom_call.1} parent=1 // pred_check
      _
    $region11: #{tpu_custom_call.1} parent=1 // pred_check_branch
      %26 = sbr.rel (0) target = $region13
    $region12: #{tpu_custom_call.1} parent=1 // pred_region
      %s28 = ssub.s32 256, 256
      %29 = vsyncadd [#allocation4], %s28
      %s31 = sshll.u32 [#allocation5], 4
      %s32 = int_to_ptr.vmem [resolvable:$true] %s31
      %34 = dma.vmem_to_hbm [thread:$0]  %s32, 256, %s1, [#allocation4]
    $region13: #{tpu_custom_call.1} parent=1 // pred_fallthru
      _
    // Predicated region
    $region14: #{tpu_custom_call.1} parent=1 // pred_check
      _
    $region15: #{tpu_custom_call.1} parent=1 // pred_check_branch
      %36 = sbr.rel (0) target = $region17
    $region16: #{tpu_custom_call.1} parent=1 // pred_region
      %37 = dma.done [#allocation4], 256
    $region17: #{tpu_custom_call.1} parent=1 // pred_fallthru
      _
    %38 = vsyncpa [#allocation3], 1
    %39 = vsyncpa [#allocation4], 1

</llo_original>
